<compile_context>
chip_gen: v7x
topology: tpu7x:2x2x1
jax: 0.10.0
libtpu: 0.0.40
codegen_flags: <defaults>
</compile_context>

<pallas_src>
import jax
import jax.numpy as jnp
from jax.experimental import pallas as pl
from jax.experimental.pallas import tpu as pltpu


def _graph_conv_kernel(sT_ref, xT_ref, wext_ref, bias_ref, oT_ref, y_ref):
    """One grid step = (one N-column tile) x (TB batch elements).

    sT_ref:   (K, N, TN)        S_k^T column tile (whole array when TN == N)
    xT_ref:   (TB, D, N)        x^T for TB batch elements (full contraction dim)
    wext_ref: (O, (K+1)*D)      [W permuted to k-major | sum_k W_k]  (resident)
    bias_ref: (O, 1)            Linear bias, f32                     (resident)
    oT_ref:   (TB, O, TN)       out^T tile
    y_ref:    (TB, (K+1)*D, TN) VMEM scratch: [x^T S_0^T; ...; x^T S_{K-1}^T; x^T]
    """
    K, _, TN = sT_ref.shape
    TB, D, N = xT_ref.shape

    # ---- Stage 1: batched over TB so the MXU LHS has TB*D rows, not D.
    # (reshape only collapses the leading dims; layout-free when D % 8 == 0 f32)
    x_flat = xT_ref[...].reshape(TB * D, N)                       # (TB*D, N)
    for k in range(K):                                            # K tiny, static
        yk = jnp.dot(x_flat, sT_ref[k],                           # (TB*D, TN)
                     preferred_element_type=jnp.float32)
        # Write into sublane-aligned scratch (avoids concat relayout passes).
        y_ref[:, k * D:(k + 1) * D, :] = yk.reshape(TB, D, TN).astype(y_ref.dtype)

    # ---- Identity term: (S_k + I) is folded into the trailing Wsum weight
    # block, so the last D scratch rows just hold x^T restricted to this tile.
    if TN == N:
        x_tile = xT_ref[...]
    else:
        col0 = pl.multiple_of(pl.program_id(0) * TN, TN)
        x_tile = xT_ref[:, :, pl.ds(col0, TN)]
    y_ref[:, K * D:, :] = x_tile.astype(y_ref.dtype)

    # ---- Stage 2: one fused (O,(K+1)D) @ ((K+1)D, TN) matmul per batch element
    # (negligible FLOPs vs stage 1); lane-dense (O, TN) stores, f32 accumulate.
    w_ext = wext_ref[...]
    bias = bias_ref[...]
    for tb in range(TB):
        acc = jnp.dot(w_ext, y_ref[tb], preferred_element_type=jnp.float32)
        oT_ref[tb] = (acc + bias).astype(oT_ref.dtype)


def prepare_graph_conv_params(supports, w_out, b_out, *, compute_dtype=jnp.float32):
    """Hoist all parameter-side layout work out of the forward path (done once).

    supports: [K, N, N] dense stack of support matrices S_k (module adds + I)
    w_out:    [O, D*K]  nn.Linear weight, feature index = d*K + k
    b_out:    [O]

    Returns (sT, w_ext, bias):
      sT:    [K, N, N]     S_k^T in compute dtype (bf16 recommended on v6e/v7x)
      w_ext: [O, (K+1)*D]  [W permuted to k*D+d | sum_k W_k]; the trailing block
                           folds the "+ I" of every support into stage 2
      bias:  [O, 1] f32
    """
    K, N, _ = supports.shape
    O, DK = w_out.shape
    D = DK // K
    sT = jnp.transpose(supports, (0, 2, 1)).astype(compute_dtype)
    w_r = w_out.reshape(O, D, K)
    w_perm = jnp.transpose(w_r, (0, 2, 1)).reshape(O, K * D)      # [o, k*D + d]
    w_sum = jnp.sum(w_r, axis=2)                                  # [O, D] identity term
    w_ext = jnp.concatenate([w_perm, w_sum], axis=1).astype(compute_dtype)
    bias = b_out.reshape(O, 1).astype(jnp.float32)
    return sT, w_ext, bias


def graph_conv_mx(inputs, params, *, block_b=None, block_n=None,
                  vmem_limit_bytes=None):
    """Forward pass.  inputs: [B, N, D]; params from prepare_graph_conv_params.
    Returns [B, N, O] (matches the PyTorch module)."""
    sT, w_ext, bias = params
    B, N, D = inputs.shape
    K = sT.shape[0]
    O, F = w_ext.shape
    assert sT.shape == (K, N, N)
    assert F == (K + 1) * D, (F, K, D)

    cdt = sT.dtype
    isz = jnp.dtype(cdt).itemsize
    out_dtype = inputs.dtype
    osz = jnp.dtype(out_dtype).itemsize

    # ---- batch tile: grow stage-1 MXU rows to ~256 (>=128 already fine on v5e)
    if block_b is None:
        block_b = max(1, min(B, 256 // max(D, 1)))
    TB = max(1, min(block_b, B))
    b_tiles = pl.cdiv(B, TB)
    B_pad = b_tiles * TB

    # ---- physical VMEM budget (clamp; v7x has only 64 MiB per TensorCore)
    try:
        vmem_cap = int(pltpu.get_tpu_info().vmem_capacity_bytes)
    except Exception:
        vmem_cap = 64 << 20
    budget = int(0.6 * vmem_cap)

    # ---- N tile: stream S^T column tiles only when full residency won't fit.
    if block_n is None:
        TN = N
        if K * N * N * isz > budget and N % 128 == 0:
            for cand in range(N - 128, 0, -128):   # largest 128-multiple divisor that fits
                if N % cand == 0 and 2 * K * N * cand * isz <= budget:
                    TN = cand
                    break
    else:
        TN = block_n
    assert N % TN == 0, (N, TN)
    assert TN == N or TN % 128 == 0, "streamed supports tile must be a multiple of 128 lanes"
    n_tiles = N // TN

    # ---- per-call layout plumbing for activations only (params pre-transposed)
    xT = jnp.transpose(inputs, (0, 2, 1)).astype(cdt)             # [B, D, N]
    if B_pad != B:
        xT = jnp.pad(xT, ((0, B_pad - B), (0, 0), (0, 0)))

    # ---- VMEM accounting + compiler params
    resident = w_ext.size * isz + bias.size * 4
    if n_tiles == 1:
        # whole S^T passed via memory_space=VMEM: single-buffered, one DMA total
        sup_spec = pl.BlockSpec(memory_space=pltpu.MemorySpace.VMEM)
        resident += K * N * N * isz
    else:
        # streamed column tiles, double-buffered, index depends only on the
        # OUTER grid axis -> fetched once per tile, reused across all batches
        sup_spec = pl.BlockSpec((K, N, TN), lambda nt, bt: (0, 0, nt))
        resident += 2 * K * N * TN * isz
    streamed = 2 * (TB * D * N * isz + TB * O * TN * osz)
    scratch_bytes = TB * F * TN * isz
    vmem_need = int(1.25 * (resident + streamed + scratch_bytes))

    cparams = {"dimension_semantics": ("parallel", "parallel")}
    if vmem_limit_bytes is not None:
        cparams["vmem_limit_bytes"] = int(vmem_limit_bytes)
    elif vmem_need > (16 << 20):            # above v5e's scoped default
        cparams["vmem_limit_bytes"] = min(vmem_need, vmem_cap)

    outT = pl.pallas_call(
        _graph_conv_kernel,
        out_shape=jax.ShapeDtypeStruct((B_pad, O, N), out_dtype),
        grid_spec=pltpu.PrefetchScalarGridSpec(
            num_scalar_prefetch=0,
            grid=(n_tiles, b_tiles),          # N-tile outer, batch inner
            in_specs=[
                sup_spec,                                              # S^T
                pl.BlockSpec((TB, D, N), lambda nt, bt: (bt, 0, 0)),   # x^T batch tile
                pl.BlockSpec(memory_space=pltpu.MemorySpace.VMEM),     # fused weight (resident)
                pl.BlockSpec(memory_space=pltpu.MemorySpace.VMEM),     # bias (resident)
            ],
            out_specs=pl.BlockSpec((TB, O, TN), lambda nt, bt: (bt, 0, nt)),
            scratch_shapes=[pltpu.VMEM((TB, F, TN), cdt)],
        ),
        compiler_params=pltpu.CompilerParams(**cparams),
    )(sT, xT, w_ext, bias)

    out = jnp.transpose(outT, (0, 2, 1))                          # [B_pad, N, O]
    return out[:B] if B_pad != B else out


def reference(inputs, supports, w_out, b_out):
    """Straight transcription of the PyTorch forward for validation."""
    B, N, D = inputs.shape
    x0 = jnp.transpose(inputs, (1, 2, 0)).reshape(N, -1)           # [N, D*B]
    xs = [(supports[i] + jnp.eye(N, dtype=supports.dtype)) @ x0
          for i in range(supports.shape[0])]
    x = jnp.stack(xs, 0)                                           # [K, N, D*B]
    x = x.reshape(-1, N, D, B)                                     # [K, N, D, B]
    x = jnp.transpose(x, (3, 1, 2, 0))                             # [B, N, D, K]
    x = x.reshape(B, N, -1)                                        # [B, N, D*K]
    return x @ w_out.T + b_out                                     # [B, N, O]


if __name__ == "__main__":
    B, N, D, K, O = 2, 16, 8, 3, 32   # batch, num_nodes, input_dim, n_supports, output_dim

    key = jax.random.PRNGKey(0)
    k_x, k_s, k_w, k_b = jax.random.split(key, 4)

    inputs   = jax.random.normal(k_x, (B, N, D), dtype=jnp.float32)
    # TODO(synk): the PyTorch module takes sparse support tensors; densified here.
    supports = jax.random.normal(k_s, (K, N, N), dtype=jnp.float32) * 0.1
    # nn.Linear(D*K, O): weight [O, D*K], bias [O] (deterministic synthetic init)
    w_out = jax.random.normal(k_w, (O, D * K), dtype=jnp.float32) * (1.0 / (D * K) ** 0.5)
    b_out = jax.random.normal(k_b, (O,), dtype=jnp.float32) * 0.01

    # Parameters are prepared ONCE (transposes / permutations hoisted off the
    # forward path); the forward call only transposes the activations.
    params = prepare_graph_conv_params(supports, w_out, b_out,
                                       compute_dtype=jnp.float32)

    out = graph_conv_mx(inputs, params)
    out = jax.block_until_ready(out)

    ref = reference(inputs, supports, w_out, b_out)
    assert out.shape == (B, N, O), out.shape
    assert jnp.allclose(out, ref, atol=1e-4, rtol=1e-4), float(jnp.max(jnp.abs(out - ref)))

    print("KERNEL_OK")
</pallas_src>

<mosaic_0001>
module attributes {stable_mosaic.version = 11 : i64} {
  func.func @_graph_conv_kernel(%arg0: i32, %arg1: i32, %arg2: memref<3x16x16xf32, #tpu.memory_space<vmem>>, %arg3: memref<2x8x16xf32, #tpu.memory_space<vmem>>, %arg4: memref<32x32xf32, #tpu.memory_space<vmem>>, %arg5: memref<32x1xf32, #tpu.memory_space<vmem>>, %arg6: memref<2x32x16xf32, #tpu.memory_space<vmem>>, %arg7: memref<2x32x16xf32, #tpu.memory_space<vmem>>) attributes {dimension_semantics = [#tpu.dimension_semantics<parallel>, #tpu.dimension_semantics<parallel>], iteration_bounds = array<i64: 1, 1>, scalar_prefetch = 0 : i64, scratch_operands = 1 : i64, tpu.core_type = #tpu.core_type<tc>, window_params = [{pipeline_mode = #tpu.pipeline_mode<synchronous>, transform_indices = @transform_0, window_bounds = array<i64: 3, 16, 16>}, {transform_indices = @transform_1, window_bounds = array<i64: 2, 8, 16>}, {pipeline_mode = #tpu.pipeline_mode<synchronous>, transform_indices = @transform_2, window_bounds = array<i64: 32, 32>}, {pipeline_mode = #tpu.pipeline_mode<synchronous>, transform_indices = @transform_3, window_bounds = array<i64: 32, 1>}, {transform_indices = @transform_4, window_bounds = array<i64: 2, 32, 16>}]} {
    %c0 = arith.constant 0 : index
    %c0_0 = arith.constant 0 : index
    %c0_1 = arith.constant 0 : index
    %0 = vector.load %arg3[%c0, %c0_0, %c0_1] : memref<2x8x16xf32, #tpu.memory_space<vmem>>, vector<2x8x16xf32>
    %1 = vector.shape_cast %0 : vector<2x8x16xf32> to vector<16x16xf32>
    %c0_2 = arith.constant 0 : index
    %c0_3 = arith.constant 0 : index
    %c0_4 = arith.constant 0 : index
    %2 = vector.load %arg2[%c0_2, %c0_3, %c0_4] : memref<3x16x16xf32, #tpu.memory_space<vmem>>, vector<1x16x16xf32>
    %3 = vector.shape_cast %2 : vector<1x16x16xf32> to vector<16x16xf32>
    %cst = arith.constant dense<0.000000e+00> : vector<16x16xf32>
    %4 = tpu.matmul %1, %3, %cst {dimension_numbers = #tpu.dot_dimension_numbers<[1], [0], [0], [1], [0, 0, 1, 1], [], []>} : vector<16x16xf32>, vector<16x16xf32>, vector<16x16xf32> -> vector<16x16xf32>
    %5 = vector.shape_cast %4 : vector<16x16xf32> to vector<2x8x16xf32>
    %c0_5 = arith.constant 0 : index
    %c0_6 = arith.constant 0 : index
    %c0_7 = arith.constant 0 : index
    %6 = vector.load %arg7[%c0_5, %c0_6, %c0_7] : memref<2x32x16xf32, #tpu.memory_space<vmem>>, vector<2x8x16xf32>
    tpu.vector_store %arg7[%c0_5, %c0_6, %c0_7], %5 {strides = array<i32>} : memref<2x32x16xf32, #tpu.memory_space<vmem>>, vector<2x8x16xf32>,
    %c1 = arith.constant 1 : index
    %c0_8 = arith.constant 0 : index
    %c0_9 = arith.constant 0 : index
    %7 = vector.load %arg2[%c1, %c0_8, %c0_9] : memref<3x16x16xf32, #tpu.memory_space<vmem>>, vector<1x16x16xf32>
    %8 = vector.shape_cast %7 : vector<1x16x16xf32> to vector<16x16xf32>
    %cst_10 = arith.constant dense<0.000000e+00> : vector<16x16xf32>
    %9 = tpu.matmul %1, %8, %cst_10 {dimension_numbers = #tpu.dot_dimension_numbers<[1], [0], [0], [1], [0, 0, 1, 1], [], []>} : vector<16x16xf32>, vector<16x16xf32>, vector<16x16xf32> -> vector<16x16xf32>
    %10 = vector.shape_cast %9 : vector<16x16xf32> to vector<2x8x16xf32>
    %c0_11 = arith.constant 0 : index
    %c8 = arith.constant 8 : index
    %c0_12 = arith.constant 0 : index
    %11 = vector.load %arg7[%c0_11, %c8, %c0_12] : memref<2x32x16xf32, #tpu.memory_space<vmem>>, vector<2x8x16xf32>
    tpu.vector_store %arg7[%c0_11, %c8, %c0_12], %10 {strides = array<i32>} : memref<2x32x16xf32, #tpu.memory_space<vmem>>, vector<2x8x16xf32>,
    %c2 = arith.constant 2 : index
    %c0_13 = arith.constant 0 : index
    %c0_14 = arith.constant 0 : index
    %12 = vector.load %arg2[%c2, %c0_13, %c0_14] : memref<3x16x16xf32, #tpu.memory_space<vmem>>, vector<1x16x16xf32>
    %13 = vector.shape_cast %12 : vector<1x16x16xf32> to vector<16x16xf32>
    %cst_15 = arith.constant dense<0.000000e+00> : vector<16x16xf32>
    %14 = tpu.matmul %1, %13, %cst_15 {dimension_numbers = #tpu.dot_dimension_numbers<[1], [0], [0], [1], [0, 0, 1, 1], [], []>} : vector<16x16xf32>, vector<16x16xf32>, vector<16x16xf32> -> vector<16x16xf32>
    %15 = vector.shape_cast %14 : vector<16x16xf32> to vector<2x8x16xf32>
    %c0_16 = arith.constant 0 : index
    %c16 = arith.constant 16 : index
    %c0_17 = arith.constant 0 : index
    %16 = vector.load %arg7[%c0_16, %c16, %c0_17] : memref<2x32x16xf32, #tpu.memory_space<vmem>>, vector<2x8x16xf32>
    tpu.vector_store %arg7[%c0_16, %c16, %c0_17], %15 {strides = array<i32>} : memref<2x32x16xf32, #tpu.memory_space<vmem>>, vector<2x8x16xf32>,
    %c0_18 = arith.constant 0 : index
    %c0_19 = arith.constant 0 : index
    %c0_20 = arith.constant 0 : index
    %17 = vector.load %arg3[%c0_18, %c0_19, %c0_20] : memref<2x8x16xf32, #tpu.memory_space<vmem>>, vector<2x8x16xf32>
    %c0_21 = arith.constant 0 : index
    %c24 = arith.constant 24 : index
    %c0_22 = arith.constant 0 : index
    %18 = vector.load %arg7[%c0_21, %c24, %c0_22] : memref<2x32x16xf32, #tpu.memory_space<vmem>>, vector<2x8x16xf32>
    tpu.vector_store %arg7[%c0_21, %c24, %c0_22], %17 {strides = array<i32>} : memref<2x32x16xf32, #tpu.memory_space<vmem>>, vector<2x8x16xf32>,
    %c0_23 = arith.constant 0 : index
    %c0_24 = arith.constant 0 : index
    %19 = vector.load %arg4[%c0_23, %c0_24] : memref<32x32xf32, #tpu.memory_space<vmem>>, vector<32x32xf32>
    %c0_25 = arith.constant 0 : index
    %c0_26 = arith.constant 0 : index
    %20 = vector.load %arg5[%c0_25, %c0_26] : memref<32x1xf32, #tpu.memory_space<vmem>>, vector<32x1xf32>
    %c0_27 = arith.constant 0 : index
    %c0_28 = arith.constant 0 : index
    %c0_29 = arith.constant 0 : index
    %21 = vector.load %arg7[%c0_27, %c0_28, %c0_29] : memref<2x32x16xf32, #tpu.memory_space<vmem>>, vector<1x32x16xf32>
    %22 = vector.shape_cast %21 : vector<1x32x16xf32> to vector<32x16xf32>
    %cst_30 = arith.constant dense<0.000000e+00> : vector<32x16xf32>
    %23 = tpu.matmul %19, %22, %cst_30 {dimension_numbers = #tpu.dot_dimension_numbers<[1], [0], [0], [1], [0, 0, 1, 1], [], []>} : vector<32x32xf32>, vector<32x16xf32>, vector<32x16xf32> -> vector<32x16xf32>
    %24 = vector.broadcast %20 : vector<32x1xf32> to vector<32x16xf32>
    %25 = arith.addf %23, %24 : vector<32x16xf32>
    %c0_31 = arith.constant 0 : index
    %c0_32 = arith.constant 0 : index
    %c0_33 = arith.constant 0 : index
    %26 = vector.load %arg6[%c0_31, %c0_32, %c0_33] : memref<2x32x16xf32, #tpu.memory_space<vmem>>, vector<1x32x16xf32>
    %27 = vector.shape_cast %26 : vector<1x32x16xf32> to vector<32x16xf32>
    %28 = vector.shape_cast %25 : vector<32x16xf32> to vector<1x32x16xf32>
    tpu.vector_store %arg6[%c0_31, %c0_32, %c0_33], %28 {strides = array<i32>} : memref<2x32x16xf32, #tpu.memory_space<vmem>>, vector<1x32x16xf32>,
    %c1_34 = arith.constant 1 : index
    %c0_35 = arith.constant 0 : index
    %c0_36 = arith.constant 0 : index
    %29 = vector.load %arg7[%c1_34, %c0_35, %c0_36] : memref<2x32x16xf32, #tpu.memory_space<vmem>>, vector<1x32x16xf32>
    %30 = vector.shape_cast %29 : vector<1x32x16xf32> to vector<32x16xf32>
    %cst_37 = arith.constant dense<0.000000e+00> : vector<32x16xf32>
    %31 = tpu.matmul %19, %30, %cst_37 {dimension_numbers = #tpu.dot_dimension_numbers<[1], [0], [0], [1], [0, 0, 1, 1], [], []>} : vector<32x32xf32>, vector<32x16xf32>, vector<32x16xf32> -> vector<32x16xf32>
    %32 = vector.broadcast %20 : vector<32x1xf32> to vector<32x16xf32>
    %33 = arith.addf %31, %32 : vector<32x16xf32>
    %c1_38 = arith.constant 1 : index
    %c0_39 = arith.constant 0 : index
    %c0_40 = arith.constant 0 : index
    %34 = vector.load %arg6[%c1_38, %c0_39, %c0_40] : memref<2x32x16xf32, #tpu.memory_space<vmem>>, vector<1x32x16xf32>
    %35 = vector.shape_cast %34 : vector<1x32x16xf32> to vector<32x16xf32>
    %36 = vector.shape_cast %33 : vector<32x16xf32> to vector<1x32x16xf32>
    tpu.vector_store %arg6[%c1_38, %c0_39, %c0_40], %36 {strides = array<i32>} : memref<2x32x16xf32, #tpu.memory_space<vmem>>, vector<1x32x16xf32>,
    return
  }
  func.func @transform_0(%arg0: i32, %arg1: i32) -> (i32, i32, i32) {
    %c0_i32 = arith.constant 0 : i32
    %c0_i32_0 = arith.constant 0 : i32
    %c0_i32_1 = arith.constant 0 : i32
    %c0_i32_2 = arith.constant 0 : i32
    return %c0_i32, %c0_i32_0, %c0_i32_1 : i32, i32, i32
  }
  func.func @transform_1(%arg0: i32, %arg1: i32) -> (i32, i32, i32) {
    %c0_i32 = arith.constant 0 : i32
    %c0_i32_0 = arith.constant 0 : i32
    %c0_i32_1 = arith.constant 0 : i32
    return %arg1, %c0_i32, %c0_i32_0 : i32, i32, i32
  }
  func.func @transform_2(%arg0: i32, %arg1: i32) -> (i32, i32) {
    %c0_i32 = arith.constant 0 : i32
    %c0_i32_0 = arith.constant 0 : i32
    %c0_i32_1 = arith.constant 0 : i32
    return %c0_i32, %c0_i32_0 : i32, i32
  }
  func.func @transform_3(%arg0: i32, %arg1: i32) -> (i32, i32) {
    %c0_i32 = arith.constant 0 : i32
    %c0_i32_0 = arith.constant 0 : i32
    %c0_i32_1 = arith.constant 0 : i32
    return %c0_i32, %c0_i32_0 : i32, i32
  }
  func.func @transform_4(%arg0: i32, %arg1: i32) -> (i32, i32, i32) {
    %c0_i32 = arith.constant 0 : i32
    %c0_i32_0 = arith.constant 0 : i32
    return %arg1, %c0_i32, %arg0 : i32, i32, i32
  }
}

</mosaic_0001>

<llo_original>
// kernel: tpu_custom_call.1
$region0: #{tpu_custom_call.1}
  #allocation0 [shape = 'u32[]', space=smem, size = 0x4, offset = 0x4, fixed_abs, tag = 'smem constant byte address 0x4 - core index']
  #allocation1 [shape = 'u32[144,128]{1,0:T(1,128)}', space=vmem, size = 0x12000, scoped, tag = 'internal scratch']
  #allocation2 [shape = 'f32[2,32,16]{2,1,0:T(8,128)}', space=vmem, size = 0x8000, scoped, tag = 'scratch operand']
  %s0 = inlined_call_operand.hbm [shape: f32[3,16,16], index: 0, kind: input, shape index: {}]
  %s1 = inlined_call_operand.hbm [shape: f32[2,8,16], index: 1, kind: input, shape index: {}]
  %s2 = inlined_call_operand.vmem [shape: f32[32,32], index: 2, kind: input, shape index: {}]
  %s3 = inlined_call_operand.vmem [shape: f32[32,1], index: 3, kind: input, shape index: {}]
  %s4 = inlined_call_operand.vmem [shape: f32[2,32,16], index: 4, kind: output, shape index: {}]
  %s5 = sld [smem:[#allocation0]]
  $region34: #{tpu_custom_call.1} parent=0
    _
  %s7 = ssub.s32 1, %s5
  %s8 = scalar_select 0, %s7, %s5
  $region1: #{tpu_custom_call.1} parent=0
    #allocation3 [shape = 'u8[24576]{0}', space=vmem, size = 0x6000, scoped, tag = 'input window, operand 0, single buffered']
    #allocation4 [shape = 's32[1]{0}', space=sflag, size = 0x4, scoped, tag = 'scoped memory for tpu_custom_call.1']
    #allocation5 [shape = 'u8[8192]{0}', space=vmem, size = 0x2000, scoped, tag = 'input window, operand 1, single buffered']
    #allocation6 [shape = 's32[1]{0}', space=sflag, size = 0x4, scoped, tag = 'scoped memory for tpu_custom_call.1']
    %9 = vsyncpa [#allocation4], 0
    %10 = vsyncpa [#allocation6], 0
    // Predicated region
    $region2: #{tpu_custom_call.1} parent=1 // pred_check
      _
    $region3: #{tpu_custom_call.1} parent=1 // pred_check_branch
      %12 = sbr.rel (0) target = $region5
    $region4: #{tpu_custom_call.1} parent=1 // pred_region
      %s14 = ssub.s32 768, 768
      %15 = vsyncadd [#allocation4], %s14
      %s16 = sshll.u32 [#allocation3], 4
      %s17 = int_to_ptr.vmem [resolvable:$true] %s16
      %22 = dma.hbm_to_vmem [thread:$0]  %s0, 768, %s17, [#allocation4], 128, 128, 8
    $region5: #{tpu_custom_call.1} parent=1 // pred_fallthru
      _
    // Predicated region
    $region6: #{tpu_custom_call.1} parent=1 // pred_check
      _
    $region7: #{tpu_custom_call.1} parent=1 // pred_check_branch
      %24 = sbr.rel (0) target = $region9
    $region8: #{tpu_custom_call.1} parent=1 // pred_region
      %s26 = ssub.s32 256, 256
      %27 = vsyncadd [#allocation6], %s26
      %s28 = sshll.u32 [#allocation5], 4
      %s29 = int_to_ptr.vmem [resolvable:$true] %s28
      %34 = dma.hbm_to_vmem [thread:$0]  %s1, 256, %s29, [#allocation6], 128, 128, 8
    $region9: #{tpu_custom_call.1} parent=1 // pred_fallthru
      _
    // Predicated region
    $region10: #{tpu_custom_call.1} parent=1 // pred_check
      _
    $region11: #{tpu_custom_call.1} parent=1 // pred_check_branch
      %36 = sbr.rel (0) target = $region13
    $region12: #{tpu_custom_call.1} parent=1 // pred_region
      _
    $region13: #{tpu_custom_call.1} parent=1 // pred_fallthru
      _
    // Predicated region
    $region14: #{tpu_custom_call.1} parent=1 // pred_check
      _
    $region15: #{tpu_custom_call.1} parent=1 // pred_check_branch
      %38 = sbr.rel (0) target = $region17
    $region16: #{tpu_custom_call.1} parent=1 // pred_region
      _
    $region17: #{tpu_custom_call.1} parent=1 // pred_fallthru
      _
    // Predicated region
    $region18: #{tpu_custom_call.1} parent=1 // pred_check
      _
    $region19: #{tpu_custom_call.1} parent=1 // pred_check_branch
      %40 = sbr.rel (0) target = $region21
    $region20: #{tpu_custom_call.1} parent=1 // pred_region
      %41 = dma.done [#allocation4], 768
    $region21: #{tpu_custom_call.1} parent=1 // pred_fallthru
      _
    // Predicated region
    $region22: #{tpu_custom_call.1} parent=1 // pred_check
      _
    $region23: #{tpu_custom_call.1} parent=1 // pred_check_branch
      %43 = sbr.rel (0) target = $region25
    $region24: #{tpu_custom_call.1} parent=1 // pred_region
      %44 = dma.done [#allocation6], 256
    $region25: #{tpu_custom_call.1} parent=1 // pred_fallthru
      _
    %v45 = vld [vmem:[#allocation5] sm:$0xff]
    %v46 = vld [vmem:[#allocation5 + $0x8] sm:$0xff]
    %v47 = vld [vmem:[#allocation3] sm:$0xff]
    %v48 = vld [vmem:[#allocation3 + $0x8] sm:$0xff]
    %vm49 = vcmask 130048
    %v51 = vsel %vm49, %v45, 0
    %v54 = vsel %vm49, %v46, 0
    %56 = vmatprep.subr.mxu0 0.0
    %57 = vmatpush1.msra.mxu0 %v47
    %58 = vmatprep.subr.mxu0 0.0
    %59 = vmatpush1.msra.mxu0 %v48
    %60 = vmatprep.subr.mxu0 0.0
    %61 = vmatpush1.msra.mxu0 0.0
    %62 = vmatprep.subr.mxu0 0.0
    %63 = vmatpush1.msra.mxu0 0.0
    %64 = vmatprep.subr.mxu0 0.0
    %65 = vmatpush1.msra.mxu0 0.0
    %66 = vmatprep.subr.mxu0 0.0
    %67 = vmatpush1.msra.mxu0 0.0
    %68 = vmatprep.subr.mxu0 0.0
    %69 = vmatpush1.msra.mxu0 0.0
    %70 = vmatprep.subr.mxu0 0.0
    %71 = vmatpush1.msra.mxu0 0.0
    %72 = vmatprep.subr.mxu0 0.0
    %73 = vmatpush1.msra.mxu0 0.0
    %74 = vmatprep.subr.mxu0 0.0
    %75 = vmatpush1.msra.mxu0 0.0
    %76 = vmatprep.subr.mxu0 0.0
    %77 = vmatpush1.msra.mxu0 0.0
    %78 = vmatprep.subr.mxu0 0.0
    %79 = vmatpush1.msra.mxu0 0.0
    %80 = vmatprep.subr.mxu0 0.0
    %81 = vmatpush1.msra.mxu0 0.0
    %82 = vmatprep.subr.mxu0 0.0
    %83 = vmatpush1.msra.mxu0 0.0
    %84 = vmatprep.subr.mxu0 0.0
    %85 = vmatpush1.msra.mxu0 0.0
    %86 = vmatprep.subr.mxu0 0.0
    %87 = vmatpush1.msra.mxu0 0.0
    %88 = vmatprep.subr.mxu0 0.0
    %89 = vmatpush1.msra.mxu0 0.0
    %90 = vmatprep.subr.mxu0 0.0
    %91 = vmatpush1.msra.mxu0 0.0
    %92 = vmatprep.subr.mxu0 0.0
    %93 = vmatpush1.msra.mxu0 0.0
    %94 = vmatprep.subr.mxu0 0.0
    %95 = vmatpush1.msra.mxu0 0.0
    %96 = vmatprep.subr.mxu0 0.0
    %97 = vmatpush1.msra.mxu0 0.0
    %98 = vmatprep.subr.mxu0 0.0
    %99 = vmatpush1.msra.mxu0 0.0
    %100 = vmatprep.subr.mxu0 0.0
    %101 = vmatpush1.msra.mxu0 0.0
    %102 = vmatprep.subr.mxu0 0.0
    %103 = vmatpush1.msra.mxu0 0.0
    %104 = vmatprep.subr.mxu0 0.0
    %105 = vmatpush1.msra.mxu0 0.0
    %106 = vmatprep.subr.mxu0 0.0
    %107 = vmatpush1.msra.mxu0 0.0
    %108 = vmatprep.subr.mxu0 0.0
    %109 = vmatpush1.msra.mxu0 0.0
    %110 = vmatprep.subr.mxu0 0.0
    %111 = vmatpush1.msra.mxu0 0.0
    %112 = vmatprep.subr.mxu0 0.0
    %113 = vmatpush1.msra.mxu0 0.0
    %114 = vmatprep.subr.mxu0 0.0
    %115 = vmatpush1.msra.mxu0 0.0
    %116 = vmatprep.subr.mxu0 0.0
    %117 = vmatpush1.msra.mxu0 0.0
    %118 = vmatprep.subr.mxu0 0.0
    %119 = vmatpush1.msra.mxu0 0.0
    %120 = vmatprep.mubr.f32.mxu0 0.0
    %121 = vmatmul.mubr.f32.gmra.mrb[0].mxu0 %v51
    %v122 = vpop.f32.mrb[0].mxu0
    %v123 = vadd.f32 0.0, %v122
    %v124 = vpop.f32.mrb[0].mxu0
    %125 = vmatprep.mubr.f32.mxu0 0.0
    %126 = vmatmul.mubr.f32.gmra.mrb[0].mxu0 %v54
    %v127 = vpop.f32.mrb[0].mxu0
    %v128 = vadd.f32 0.0, %v127
    %v129 = vpop.f32.mrb[0].mxu0
    %130 = vdwg.mxu0
    %131 = vst.msk [vmem:[#allocation2] sm:$0xff] %vm49, %v123
    %132 = vst.msk [vmem:[#allocation2 + $0x20] sm:$0xff] %vm49, %v128
    %s133 = scalar_lea.vmem [#allocation3], 16
    %v134 = vld [vmem:[%s133] sm:$0xff]
    %v135 = vld [vmem:[%s133 + $0x8] sm:$0xff]
    %136 = vmatprep.subr.mxu0 0.0
    %137 = vmatpush1.msra.mxu0 %v134
    %138 = vmatprep.subr.mxu0 0.0
    %139 = vmatpush1.msra.mxu0 %v135
    %140 = vmatprep.subr.mxu0 0.0
    %141 = vmatpush1.msra.mxu0 0.0
    %142 = vmatprep.subr.mxu0 0.0
    %143 = vmatpush1.msra.mxu0 0.0
    %144 = vmatprep.subr.mxu0 0.0
    %145 = vmatpush1.msra.mxu0 0.0
    %146 = vmatprep.subr.mxu0 0.0
    %147 = vmatpush1.msra.mxu0 0.0
    %148 = vmatprep.subr.mxu0 0.0
    %149 = vmatpush1.msra.mxu0 0.0
    %150 = vmatprep.subr.mxu0 0.0
    %151 = vmatpush1.msra.mxu0 0.0
    %152 = vmatprep.subr.mxu0 0.0
    %153 = vmatpush1.msra.mxu0 0.0
    %154 = vmatprep.subr.mxu0 0.0
    %155 = vmatpush1.msra.mxu0 0.0
    %156 = vmatprep.subr.mxu0 0.0
    %157 = vmatpush1.msra.mxu0 0.0
    %158 = vmatprep.subr.mxu0 0.0
    %159 = vmatpush1.msra.mxu0 0.0
    %160 = vmatprep.subr.mxu0 0.0
    %161 = vmatpush1.msra.mxu0 0.0
    %162 = vmatprep.subr.mxu0 0.0
    %163 = vmatpush1.msra.mxu0 0.0
    %164 = vmatprep.subr.mxu0 0.0
    %165 = vmatpush1.msra.mxu0 0.0
    %166 = vmatprep.subr.mxu0 0.0
    %167 = vmatpush1.msra.mxu0 0.0
    %168 = vmatprep.subr.mxu0 0.0
    %169 = vmatpush1.msra.mxu0 0.0
    %170 = vmatprep.subr.mxu0 0.0
    %171 = vmatpush1.msra.mxu0 0.0
    %172 = vmatprep.subr.mxu0 0.0
    %173 = vmatpush1.msra.mxu0 0.0
    %174 = vmatprep.subr.mxu0 0.0
    %175 = vmatpush1.msra.mxu0 0.0
    %176 = vmatprep.subr.mxu0 0.0
    %177 = vmatpush1.msra.mxu0 0.0
    %178 = vmatprep.subr.mxu0 0.0
    %179 = vmatpush1.msra.mxu0 0.0
    %180 = vmatprep.subr.mxu0 0.0
    %181 = vmatpush1.msra.mxu0 0.0
    %182 = vmatprep.subr.mxu0 0.0
    %183 = vmatpush1.msra.mxu0 0.0
    %184 = vmatprep.subr.mxu0 0.0
    %185 = vmatpush1.msra.mxu0 0.0
    %186 = vmatprep.subr.mxu0 0.0
    %187 = vmatpush1.msra.mxu0 0.0
    %188 = vmatprep.subr.mxu0 0.0
    %189 = vmatpush1.msra.mxu0 0.0
    %190 = vmatprep.subr.mxu0 0.0
    %191 = vmatpush1.msra.mxu0 0.0
    %192 = vmatprep.subr.mxu0 0.0
    %193 = vmatpush1.msra.mxu0 0.0
    %194 = vmatprep.subr.mxu0 0.0
    %195 = vmatpush1.msra.mxu0 0.0
    %196 = vmatprep.subr.mxu0 0.0
    %197 = vmatpush1.msra.mxu0 0.0
    %198 = vmatprep.subr.mxu0 0.0
    %199 = vmatpush1.msra.mxu0 0.0
    %200 = vmatprep.mubr.f32.mxu0 0.0
    %201 = vmatmul.mubr.f32.gmra.mrb[0].mxu0 %v51
    %v202 = vpop.f32.mrb[0].mxu0
    %v203 = vadd.f32 0.0, %v202
    %v204 = vpop.f32.mrb[0].mxu0
    %205 = vmatprep.mubr.f32.mxu0 0.0
    %206 = vmatmul.mubr.f32.gmra.mrb[0].mxu0 %v54
    %v207 = vpop.f32.mrb[0].mxu0
    %v208 = vadd.f32 0.0, %v207
    %v209 = vpop.f32.mrb[0].mxu0
    %210 = vdwg.mxu0
    %211 = vst.msk [vmem:[#allocation2 + $0x8] sm:$0xff] %vm49, %v203
    %212 = vst.msk [vmem:[#allocation2 + $0x28] sm:$0xff] %vm49, %v208
    %s213 = scalar_lea.vmem [#allocation3], 32
    %v214 = vld [vmem:[%s213] sm:$0xff]
    %v215 = vld [vmem:[%s213 + $0x8] sm:$0xff]
    %216 = vmatprep.subr.mxu0 0.0
    %217 = vmatpush1.msra.mxu0 %v214
    %218 = vmatprep.subr.mxu0 0.0
    %219 = vmatpush1.msra.mxu0 %v215
    %220 = vmatprep.subr.mxu0 0.0
    %221 = vmatpush1.msra.mxu0 0.0
    %222 = vmatprep.subr.mxu0 0.0
    %223 = vmatpush1.msra.mxu0 0.0
    %224 = vmatprep.subr.mxu0 0.0
    %225 = vmatpush1.msra.mxu0 0.0
    %226 = vmatprep.subr.mxu0 0.0
    %227 = vmatpush1.msra.mxu0 0.0
    %228 = vmatprep.subr.mxu0 0.0
    %229 = vmatpush1.msra.mxu0 0.0
    %230 = vmatprep.subr.mxu0 0.0
    %231 = vmatpush1.msra.mxu0 0.0
    %232 = vmatprep.subr.mxu0 0.0
    %233 = vmatpush1.msra.mxu0 0.0
    %234 = vmatprep.subr.mxu0 0.0
    %235 = vmatpush1.msra.mxu0 0.0
    %236 = vmatprep.subr.mxu0 0.0
    %237 = vmatpush1.msra.mxu0 0.0
    %238 = vmatprep.subr.mxu0 0.0
    %239 = vmatpush1.msra.mxu0 0.0
    %240 = vmatprep.subr.mxu0 0.0
    %241 = vmatpush1.msra.mxu0 0.0
    %242 = vmatprep.subr.mxu0 0.0
    %243 = vmatpush1.msra.mxu0 0.0
    %244 = vmatprep.subr.mxu0 0.0
    %245 = vmatpush1.msra.mxu0 0.0
    %246 = vmatprep.subr.mxu0 0.0
    %247 = vmatpush1.msra.mxu0 0.0
    %248 = vmatprep.subr.mxu0 0.0
    %249 = vmatpush1.msra.mxu0 0.0
    %250 = vmatprep.subr.mxu0 0.0
    %251 = vmatpush1.msra.mxu0 0.0
    %252 = vmatprep.subr.mxu0 0.0
    %253 = vmatpush1.msra.mxu0 0.0
    %254 = vmatprep.subr.mxu0 0.0
    %255 = vmatpush1.msra.mxu0 0.0
    %256 = vmatprep.subr.mxu0 0.0
    %257 = vmatpush1.msra.mxu0 0.0
    %258 = vmatprep.subr.mxu0 0.0
    %259 = vmatpush1.msra.mxu0 0.0
    %260 = vmatprep.subr.mxu0 0.0
    %261 = vmatpush1.msra.mxu0 0.0
    %262 = vmatprep.subr.mxu0 0.0
    %263 = vmatpush1.msra.mxu0 0.0
    %264 = vmatprep.subr.mxu0 0.0
    %265 = vmatpush1.msra.mxu0 0.0
    %266 = vmatprep.subr.mxu0 0.0
    %267 = vmatpush1.msra.mxu0 0.0
    %268 = vmatprep.subr.mxu0 0.0
    %269 = vmatpush1.msra.mxu0 0.0
    %270 = vmatprep.subr.mxu0 0.0
    %271 = vmatpush1.msra.mxu0 0.0
    %272 = vmatprep.subr.mxu0 0.0
    %273 = vmatpush1.msra.mxu0 0.0
    %274 = vmatprep.subr.mxu0 0.0
    %275 = vmatpush1.msra.mxu0 0.0
    %276 = vmatprep.subr.mxu0 0.0
    %277 = vmatpush1.msra.mxu0 0.0
    %278 = vmatprep.subr.mxu0 0.0
    %279 = vmatpush1.msra.mxu0 0.0
    %280 = vmatprep.mubr.f32.mxu0 0.0
    %281 = vmatmul.mubr.f32.gmra.mrb[0].mxu0 %v51
    %v282 = vpop.f32.mrb[0].mxu0
    %v283 = vadd.f32 0.0, %v282
    %v284 = vpop.f32.mrb[0].mxu0
    %285 = vmatprep.mubr.f32.mxu0 0.0
    %286 = vmatmul.mubr.f32.gmra.mrb[0].mxu0 %v54
    %v287 = vpop.f32.mrb[0].mxu0
    %v288 = vadd.f32 0.0, %v287
    %v289 = vpop.f32.mrb[0].mxu0
    %290 = vdwg.mxu0
    %291 = vst.msk [vmem:[#allocation2 + $0x10] sm:$0xff] %vm49, %v283
    %292 = vst.msk [vmem:[#allocation2 + $0x30] sm:$0xff] %vm49, %v288
    %v293 = vld [vmem:[#allocation5] sm:$0xff]
    %v294 = vld [vmem:[#allocation5 + $0x8] sm:$0xff]
    %295 = vst.msk [vmem:[#allocation2 + $0x18] sm:$0xff] %vm49, %v293
    %296 = vst.msk [vmem:[#allocation2 + $0x38] sm:$0xff] %vm49, %v294
    %v297 = vld [vmem:[%s2] sm:$0xff]
    %v298 = vld [vmem:[%s2 + $0x8] sm:$0xff]
    %v299 = vld [vmem:[%s2 + $0x10] sm:$0xff]
    %v300 = vld [vmem:[%s2 + $0x18] sm:$0xff]
    %v301 = vld [vmem:[%s3] sm:$0xff]
    %v302 = vld [vmem:[%s3 + $0x8] sm:$0xff]
    %v303 = vld [vmem:[%s3 + $0x10] sm:$0xff]
    %v304 = vld [vmem:[%s3 + $0x18] sm:$0xff]
    %v305 = vld [vmem:[#allocation2] sm:$0xff]
    %v306 = vld [vmem:[#allocation2 + $0x8] sm:$0xff]
    %v307 = vld [vmem:[#allocation2 + $0x10] sm:$0xff]
    %v308 = vld [vmem:[#allocation2 + $0x18] sm:$0xff]
    %310 = vset.pattern.permute.xlu0 0
    %311 = vperm.xlu0 %310, %v301
    %v312 = vpop.permute.xlu0 %311
    %315 = vset.pattern.permute.xlu0 0
    %316 = vperm.xlu0 %315, %v302
    %v317 = vpop.permute.xlu0 %316
    %320 = vset.pattern.permute.xlu0 0
    %321 = vperm.xlu0 %320, %v303
    %v322 = vpop.permute.xlu0 %321
    %325 = vset.pattern.permute.xlu0 0
    %326 = vperm.xlu0 %325, %v304
    %v327 = vpop.permute.xlu0 %326
    %vm329 = vcmask 261120
    %v331 = vsel %vm329, %v297, 0
    %v334 = vsel %vm329, %v298, 0
    %v337 = vsel %vm329, %v299, 0
    %v340 = vsel %vm329, %v300, 0
    %342 = vmatprep.subr.mxu0 0.0
    %343 = vmatpush1.msra.mxu0 %v305
    %344 = vmatprep.subr.mxu0 0.0
    %345 = vmatpush1.msra.mxu0 %v306
    %346 = vmatprep.subr.mxu0 0.0
    %347 = vmatpush1.msra.mxu0 %v307
    %348 = vmatprep.subr.mxu0 0.0
    %349 = vmatpush1.msra.mxu0 %v308
    %350 = vmatprep.subr.mxu0 0.0
    %351 = vmatpush1.msra.mxu0 0.0
    %352 = vmatprep.subr.mxu0 0.0
    %353 = vmatpush1.msra.mxu0 0.0
    %354 = vmatprep.subr.mxu0 0.0
    %355 = vmatpush1.msra.mxu0 0.0
    %356 = vmatprep.subr.mxu0 0.0
    %357 = vmatpush1.msra.mxu0 0.0
    %358 = vmatprep.subr.mxu0 0.0
    %359 = vmatpush1.msra.mxu0 0.0
    %360 = vmatprep.subr.mxu0 0.0
    %361 = vmatpush1.msra.mxu0 0.0
    %362 = vmatprep.subr.mxu0 0.0
    %363 = vmatpush1.msra.mxu0 0.0
    %364 = vmatprep.subr.mxu0 0.0
    %365 = vmatpush1.msra.mxu0 0.0
    %366 = vmatprep.subr.mxu0 0.0
    %367 = vmatpush1.msra.mxu0 0.0
    %368 = vmatprep.subr.mxu0 0.0
    %369 = vmatpush1.msra.mxu0 0.0
    %370 = vmatprep.subr.mxu0 0.0
    %371 = vmatpush1.msra.mxu0 0.0
    %372 = vmatprep.subr.mxu0 0.0
    %373 = vmatpush1.msra.mxu0 0.0
    %374 = vmatprep.subr.mxu0 0.0
    %375 = vmatpush1.msra.mxu0 0.0
    %376 = vmatprep.subr.mxu0 0.0
    %377 = vmatpush1.msra.mxu0 0.0
    %378 = vmatprep.subr.mxu0 0.0
    %379 = vmatpush1.msra.mxu0 0.0
    %380 = vmatprep.subr.mxu0 0.0
    %381 = vmatpush1.msra.mxu0 0.0
    %382 = vmatprep.subr.mxu0 0.0
    %383 = vmatpush1.msra.mxu0 0.0
    %384 = vmatprep.subr.mxu0 0.0
    %385 = vmatpush1.msra.mxu0 0.0
    %386 = vmatprep.subr.mxu0 0.0
    %387 = vmatpush1.msra.mxu0 0.0
    %388 = vmatprep.subr.mxu0 0.0
    %389 = vmatpush1.msra.mxu0 0.0
    %390 = vmatprep.subr.mxu0 0.0
    %391 = vmatpush1.msra.mxu0 0.0
    %392 = vmatprep.subr.mxu0 0.0
    %393 = vmatpush1.msra.mxu0 0.0
    %394 = vmatprep.subr.mxu0 0.0
    %395 = vmatpush1.msra.mxu0 0.0
    %396 = vmatprep.subr.mxu0 0.0
    %397 = vmatpush1.msra.mxu0 0.0
    %398 = vmatprep.subr.mxu0 0.0
    %399 = vmatpush1.msra.mxu0 0.0
    %400 = vmatprep.subr.mxu0 0.0
    %401 = vmatpush1.msra.mxu0 0.0
    %402 = vmatprep.subr.mxu0 0.0
    %403 = vmatpush1.msra.mxu0 0.0
    %404 = vmatprep.subr.mxu0 0.0
    %405 = vmatpush1.msra.mxu0 0.0
    %406 = vmatprep.mubr.f32.mxu0 0.0
    %407 = vmatmul.mubr.f32.gmra.mrb[0].mxu0 %v331
    %v408 = vpop.f32.mrb[0].mxu0
    %v409 = vadd.f32 %v312, %v408
    %v410 = vpop.f32.mrb[0].mxu0
    %411 = vmatprep.mubr.f32.mxu0 0.0
    %412 = vmatmul.mubr.f32.gmra.mrb[0].mxu0 %v334
    %v413 = vpop.f32.mrb[0].mxu0
    %v414 = vadd.f32 %v317, %v413
    %v415 = vpop.f32.mrb[0].mxu0
    %416 = vmatprep.mubr.f32.mxu0 0.0
    %417 = vmatmul.mubr.f32.gmra.mrb[0].mxu0 %v337
    %v418 = vpop.f32.mrb[0].mxu0
    %v419 = vadd.f32 %v322, %v418
    %v420 = vpop.f32.mrb[0].mxu0
    %421 = vmatprep.mubr.f32.mxu0 0.0
    %422 = vmatmul.mubr.f32.gmra.mrb[0].mxu0 %v340
    %v423 = vpop.f32.mrb[0].mxu0
    %v424 = vadd.f32 %v327, %v423
    %v425 = vpop.f32.mrb[0].mxu0
    %426 = vdwg.mxu0
    %427 = vst.msk [vmem:[%s4] sm:$0xff] %vm49, %v409
    %428 = vst.msk [vmem:[%s4 + $0x8] sm:$0xff] %vm49, %v414
    %429 = vst.msk [vmem:[%s4 + $0x10] sm:$0xff] %vm49, %v419
    %430 = vst.msk [vmem:[%s4 + $0x18] sm:$0xff] %vm49, %v424
    %s431 = scalar_lea.vmem [#allocation2], 32
    %v432 = vld [vmem:[%s431] sm:$0xff]
    %v433 = vld [vmem:[%s431 + $0x8] sm:$0xff]
    %v434 = vld [vmem:[%s431 + $0x10] sm:$0xff]
    %v435 = vld [vmem:[%s431 + $0x18] sm:$0xff]
    %436 = vmatprep.subr.mxu0 0.0
    %437 = vmatpush1.msra.mxu0 %v432
    %438 = vmatprep.subr.mxu0 0.0
    %439 = vmatpush1.msra.mxu0 %v433
    %440 = vmatprep.subr.mxu0 0.0
    %441 = vmatpush1.msra.mxu0 %v434
    %442 = vmatprep.subr.mxu0 0.0
    %443 = vmatpush1.msra.mxu0 %v435
    %444 = vmatprep.subr.mxu0 0.0
    %445 = vmatpush1.msra.mxu0 0.0
    %446 = vmatprep.subr.mxu0 0.0
    %447 = vmatpush1.msra.mxu0 0.0
    %448 = vmatprep.subr.mxu0 0.0
    %449 = vmatpush1.msra.mxu0 0.0
    %450 = vmatprep.subr.mxu0 0.0
    %451 = vmatpush1.msra.mxu0 0.0
    %452 = vmatprep.subr.mxu0 0.0
    %453 = vmatpush1.msra.mxu0 0.0
    %454 = vmatprep.subr.mxu0 0.0
    %455 = vmatpush1.msra.mxu0 0.0
    %456 = vmatprep.subr.mxu0 0.0
    %457 = vmatpush1.msra.mxu0 0.0
    %458 = vmatprep.subr.mxu0 0.0
    %459 = vmatpush1.msra.mxu0 0.0
    %460 = vmatprep.subr.mxu0 0.0
    %461 = vmatpush1.msra.mxu0 0.0
    %462 = vmatprep.subr.mxu0 0.0
    %463 = vmatpush1.msra.mxu0 0.0
    %464 = vmatprep.subr.mxu0 0.0
    %465 = vmatpush1.msra.mxu0 0.0
    %466 = vmatprep.subr.mxu0 0.0
    %467 = vmatpush1.msra.mxu0 0.0
    %468 = vmatprep.subr.mxu0 0.0
    %469 = vmatpush1.msra.mxu0 0.0
    %470 = vmatprep.subr.mxu0 0.0
    %471 = vmatpush1.msra.mxu0 0.0
    %472 = vmatprep.subr.mxu0 0.0
    %473 = vmatpush1.msra.mxu0 0.0
    %474 = vmatprep.subr.mxu0 0.0
    %475 = vmatpush1.msra.mxu0 0.0
    %476 = vmatprep.subr.mxu0 0.0
    %477 = vmatpush1.msra.mxu0 0.0
    %478 = vmatprep.subr.mxu0 0.0
    %479 = vmatpush1.msra.mxu0 0.0
    %480 = vmatprep.subr.mxu0 0.0
    %481 = vmatpush1.msra.mxu0 0.0
    %482 = vmatprep.subr.mxu0 0.0
    %483 = vmatpush1.msra.mxu0 0.0
    %484 = vmatprep.subr.mxu0 0.0
    %485 = vmatpush1.msra.mxu0 0.0
    %486 = vmatprep.subr.mxu0 0.0
    %487 = vmatpush1.msra.mxu0 0.0
    %488 = vmatprep.subr.mxu0 0.0
    %489 = vmatpush1.msra.mxu0 0.0
    %490 = vmatprep.subr.mxu0 0.0
    %491 = vmatpush1.msra.mxu0 0.0
    %492 = vmatprep.subr.mxu0 0.0
    %493 = vmatpush1.msra.mxu0 0.0
    %494 = vmatprep.subr.mxu0 0.0
    %495 = vmatpush1.msra.mxu0 0.0
    %496 = vmatprep.subr.mxu0 0.0
    %497 = vmatpush1.msra.mxu0 0.0
    %498 = vmatprep.subr.mxu0 0.0
    %499 = vmatpush1.msra.mxu0 0.0
    %500 = vmatprep.mubr.f32.mxu0 0.0
    %501 = vmatmul.mubr.f32.gmra.mrb[0].mxu0 %v331
    %v502 = vpop.f32.mrb[0].mxu0
    %v503 = vadd.f32 %v312, %v502
    %v504 = vpop.f32.mrb[0].mxu0
    %505 = vmatprep.mubr.f32.mxu0 0.0
    %506 = vmatmul.mubr.f32.gmra.mrb[0].mxu0 %v334
    %v507 = vpop.f32.mrb[0].mxu0
    %v508 = vadd.f32 %v317, %v507
    %v509 = vpop.f32.mrb[0].mxu0
    %510 = vmatprep.mubr.f32.mxu0 0.0
    %511 = vmatmul.mubr.f32.gmra.mrb[0].mxu0 %v337
    %v512 = vpop.f32.mrb[0].mxu0
    %v513 = vadd.f32 %v322, %v512
    %v514 = vpop.f32.mrb[0].mxu0
    %515 = vmatprep.mubr.f32.mxu0 0.0
    %516 = vmatmul.mubr.f32.gmra.mrb[0].mxu0 %v340
    %v517 = vpop.f32.mrb[0].mxu0
    %v518 = vadd.f32 %v327, %v517
    %v519 = vpop.f32.mrb[0].mxu0
    %520 = vdwg.mxu0
    %s521 = scalar_lea.vmem %s4, 32
    %522 = vst.msk [vmem:[%s521] sm:$0xff] %vm49, %v503
    %523 = vst.msk [vmem:[%s521 + $0x8] sm:$0xff] %vm49, %v508
    %524 = vst.msk [vmem:[%s521 + $0x10] sm:$0xff] %vm49, %v513
    %525 = vst.msk [vmem:[%s521 + $0x18] sm:$0xff] %vm49, %v518
    // Predicated region
    $region26: #{tpu_custom_call.1} parent=1 // pred_check
      _
    $region27: #{tpu_custom_call.1} parent=1 // pred_check_branch
      %527 = sbr.rel (0) target = $region29
    $region28: #{tpu_custom_call.1} parent=1 // pred_region
      _
    $region29: #{tpu_custom_call.1} parent=1 // pred_fallthru
      _
    // Predicated region
    $region30: #{tpu_custom_call.1} parent=1 // pred_check
      _
    $region31: #{tpu_custom_call.1} parent=1 // pred_check_branch
      %529 = sbr.rel (0) target = $region33
    $region32: #{tpu_custom_call.1} parent=1 // pred_region
      _
    $region33: #{tpu_custom_call.1} parent=1 // pred_fallthru
      _
    %530 = vsyncpa [#allocation4], 1
    %531 = vsyncpa [#allocation6], 1

</llo_original>
